<compile_context>
chip_gen: v7x
topology: tpu7x:2x2x1
jax: 0.10.0
libtpu: 0.0.40
codegen_flags: <defaults>
</compile_context>

<pallas_src>
import functools

import jax
import jax.numpy as jnp
from jax.experimental import pallas as pl
from jax.experimental.pallas import tpu as pltpu


# --------------------------------------------------------------------------
# Kernels
# --------------------------------------------------------------------------
def _pad_seq_tiled_kernel(x_ref, o_ref, *, ts, s_left, S, d_left, d_right, D, value):
    """One (1, ts, D_out) output tile per grid step.

    x_ref: (1, ts, D) input tile (sequence tile aligned with the output tile,
           already shifted by s_left via the index_map; clamped for pure-pad tiles).
    o_ref: (1, ts, D_out) output tile.
    """
    dt = o_ref.dtype
    D_out = o_ref.shape[2]
    t = pl.program_id(1)
    row_start = t * ts  # output-row index of this tile's first row

    # Constant hidden-dim pad strips (thin, stored once; skipped entirely when
    # there is no hidden padding -> pure lane-aligned copy path).
    if d_left > 0:
        o_ref[0, :, :d_left] = jnp.full((ts, d_left), value, dt)
    if d_right > 0:
        o_ref[0, :, d_left + D:] = jnp.full((ts, D_out - d_left - D), value, dt)

    tile_fully_inside = jnp.logical_and(row_start >= s_left,
                                        row_start + ts <= s_left + S)

    @pl.when(tile_fully_inside)
    def _interior():
        # Interior tile: straight copy, one store per element.
        if d_left == 0 and d_right == 0:
            o_ref[...] = x_ref[...]
        else:
            o_ref[0, :, d_left:d_left + D] = x_ref[0]

    @pl.when(jnp.logical_not(tile_fully_inside))
    def _boundary():
        # Boundary tile: select between input rows and the pad value so each
        # element is still stored exactly once.
        rows = row_start + jax.lax.broadcasted_iota(jnp.int32, (ts, 1), 0)
        valid = jnp.logical_and(rows >= s_left, rows < s_left + S)
        center = jnp.where(valid, x_ref[0], jnp.asarray(value, dtype=dt))
        if d_left == 0 and d_right == 0:
            o_ref[0, :, :] = center
        else:
            o_ref[0, :, d_left:d_left + D] = center


def _pad_slab_kernel(x_ref, o_ref, *, s_left, s_right, d_left, d_right, S, D, value):
    """Fallback: one full (S, D) -> (S_out, D_out) slab per batch element,
    but with single-store semantics (pad strips + interior copy, no full fill)."""
    dt = o_ref.dtype
    D_out = o_ref.shape[2]
    if s_left > 0:
        o_ref[0, :s_left, :] = jnp.full((s_left, D_out), value, dt)
    if s_right > 0:
        o_ref[0, s_left + S:, :] = jnp.full((s_right, D_out), value, dt)
    if d_left > 0:
        o_ref[0, s_left:s_left + S, :d_left] = jnp.full((S, d_left), value, dt)
    if d_right > 0:
        o_ref[0, s_left:s_left + S, d_left + D:] = jnp.full((S, d_right), value, dt)
    o_ref[0, s_left:s_left + S, d_left:d_left + D] = x_ref[0]


# --------------------------------------------------------------------------
# Wrapper
# --------------------------------------------------------------------------
def pallas_pad(x, padding, value=0.0, *, seq_tile=None):
    """Equivalent of torch.nn.functional.pad(x, padding, value=value)
    for a rank-3 input with constant padding on the last one or two dims."""
    assert x.ndim == 3, "this Pad kernel handles (B, S, D) inputs"
    padding = tuple(int(p) for p in padding)
    assert len(padding) in (2, 4), "padding must cover the last one or two dims"
    if len(padding) == 2:
        padding = padding + (0, 0)
    d_left, d_right, s_left, s_right = padding
    assert min(padding) >= 0, "negative (cropping) padding not supported here"
    # TODO(synk): negative (cropping) pad values and integer `value` rounding
    # semantics beyond plain casting are not implemented.

    B, S, D = x.shape
    S_out = S + s_left + s_right
    D_out = D + d_left + d_right
    itemsize = jnp.dtype(x.dtype).itemsize
    # Sublane packing granularity per dtype (f32: 8, bf16: 16, int8: 32 rows).
    sub = {4: 8, 2: 16, 1: 32}.get(itemsize, 8)

    cost = pl.CostEstimate(
        flops=0,
        transcendentals=0,
        bytes_accessed=int((B * S * D + B * S_out * D_out) * itemsize),
    )

    # ---- choose a sequence tile so 2x(in+out) tile buffers fit the smallest
    # scoped-VMEM default (16 MiB on v5e; well under 32 MiB on v6e/v7x). ----
    budget = 12 << 20                         # bytes for one in+out tile pair, x2 buffers
    per_row = (D + D_out) * itemsize
    if seq_tile is not None:
        ts = max(sub, (int(seq_tile) // sub) * sub)
    else:
        ts = max(sub, budget // (2 * per_row))
        ts = min(1024, ts)
        ts = max(sub, (ts // sub) * sub)

    use_tiled = S_out > ts
    if use_tiled and s_left > 0:
        # Keep input tiles aligned with output tiles: tile size must divide s_left.
        t_fit = None
        t_cand = ts
        while t_cand >= sub:
            if s_left % t_cand == 0:
                t_fit = t_cand
                break
            t_cand -= sub
        if t_fit is None:
            use_tiled = False    # rare: misaligned left pad -> whole-slab fallback
        else:
            ts = t_fit

    if use_tiled:
        T = pl.cdiv(S_out, ts)
        T_in = pl.cdiv(S, ts)
        off_tiles = s_left // ts

        def in_map(b, t):
            ti = t - off_tiles
            ti = jnp.minimum(jnp.maximum(ti, 0), T_in - 1)  # clamp pure-pad tiles
            return (b, ti, 0)

        kernel = functools.partial(
            _pad_seq_tiled_kernel,
            ts=ts, s_left=s_left, S=S, d_left=d_left, d_right=d_right, D=D,
            value=value,
        )
        return pl.pallas_call(
            kernel,
            out_shape=jax.ShapeDtypeStruct((B, S_out, D_out), x.dtype),
            grid=(B, T),
            in_specs=[pl.BlockSpec((1, ts, D), in_map)],
            out_specs=pl.BlockSpec((1, ts, D_out), lambda b, t: (b, t, 0)),
            compiler_params=pltpu.CompilerParams(
                dimension_semantics=("parallel", "parallel")),
            cost_estimate=cost,
        )(x)

    # ---- fallback: whole (S, D) slab per batch element (small shapes, or
    # sequence-left-pad that cannot be tile-aligned). ----
    slab_bytes = 2 * (S * D + S_out * D_out) * itemsize
    cparams = {"dimension_semantics": ("parallel",)}
    if slab_bytes > (12 << 20):
        cparams["vmem_limit_bytes"] = int(slab_bytes + (4 << 20))

    kernel = functools.partial(
        _pad_slab_kernel,
        s_left=s_left, s_right=s_right, d_left=d_left, d_right=d_right,
        S=S, D=D, value=value,
    )
    return pl.pallas_call(
        kernel,
        out_shape=jax.ShapeDtypeStruct((B, S_out, D_out), x.dtype),
        grid=(B,),
        in_specs=[pl.BlockSpec((1, S, D), lambda b: (b, 0, 0))],
        out_specs=pl.BlockSpec((1, S_out, D_out), lambda b: (b, 0, 0)),
        compiler_params=pltpu.CompilerParams(**cparams),
        cost_estimate=cost,
    )(x)


class Pad:
    """Mirror of the PyTorch module (no learnable parameters)."""

    def __init__(self, padding, value=0.0):
        self.padding = padding
        self.value = value

    def __call__(self, x):
        return pallas_pad(x, self.padding, self.value)


# --------------------------------------------------------------------------
# Self-test
# --------------------------------------------------------------------------
def _ref_pad(x, padding, value):
    padding = tuple(int(p) for p in padding)
    if len(padding) == 2:
        padding = padding + (0, 0)
    d_l, d_r, s_l, s_r = padding
    return jnp.pad(x, ((0, 0), (s_l, s_r), (d_l, d_r)),
                   mode="constant", constant_values=value)


def _check(x, padding, value, seq_tile=None):
    out = pallas_pad(x, padding, value, seq_tile=seq_tile)
    out = jax.block_until_ready(out)
    ref = _ref_pad(x, padding, value)
    assert out.shape == ref.shape, (out.shape, ref.shape)
    assert out.dtype == ref.dtype, (out.dtype, ref.dtype)
    assert jnp.allclose(out, ref), f"Pallas pad mismatch for padding={padding}"


if __name__ == "__main__":
    key = jax.random.PRNGKey(0)
    k1, k2, k3, k4 = jax.random.split(key, 4)

    # 1) charformer-typical usage: pad the sequence dim on the right only
    #    (Pad((0, 0, 0, block_size - 1))) — small shape, whole-slab path.
    x1 = jax.random.normal(k1, (2, 8, 32), dtype=jnp.float32)
    _check(x1, (0, 0, 0, 3), 0.0)

    # 2) original demo config: sequence padded (left=1, right=2) — fallback path.
    _check(x1, (0, 0, 1, 2), 0.0)

    # 3) force the sequence-tiled path (seq_tile=16) with right-only padding
    #    and a nonzero pad value — exercises interior copy + boundary mask.
    x3 = jax.random.normal(k2, (2, 64, 128), dtype=jnp.float32)
    _check(x3, (0, 0, 0, 7), 1.5, seq_tile=16)

    # 4) tiled path with hidden-dim padding and a tile-aligned left pad.
    x4 = jax.random.normal(k3, (2, 64, 32), dtype=jnp.float32)
    _check(x4, (2, 3, 16, 8), -2.0, seq_tile=8)

    # 5) bf16 tiled path (sublane granularity 16).
    x5 = jax.random.normal(k4, (2, 48, 128), dtype=jnp.float32).astype(jnp.bfloat16)
    _check(x5, (0, 0, 0, 16), 0.0, seq_tile=16)

    print("KERNEL_OK")
</pallas_src>

<mosaic_0001>
module attributes {stable_mosaic.version = 11 : i64} {
  func.func @_pad_slab_kernel(%arg0: i32, %arg1: memref<1x8x32xf32, #tpu.memory_space<vmem>>, %arg2: memref<1x11x32xf32, #tpu.memory_space<vmem>>) attributes {dimension_semantics = [#tpu.dimension_semantics<parallel>], iteration_bounds = array<i64: 2>, scalar_prefetch = 0 : i64, scratch_operands = 0 : i64, tpu.core_type = #tpu.core_type<tc>, window_params = [{transform_indices = @transform_0, window_bounds = array<i64: 1, 8, 32>}, {transform_indices = @transform_1, window_bounds = array<i64: 1, 11, 32>}]} {
    %cst = arith.constant 0.000000e+00 : f32
    %0 = vector.broadcast %cst : f32 to vector<3x32xf32>
    %c0 = arith.constant 0 : index
    %c8 = arith.constant 8 : index
    %c0_0 = arith.constant 0 : index
    %1 = vector.load %arg2[%c0, %c8, %c0_0] : memref<1x11x32xf32, #tpu.memory_space<vmem>>, vector<1x3x32xf32>
    %2 = vector.shape_cast %1 : vector<1x3x32xf32> to vector<3x32xf32>
    %3 = vector.shape_cast %0 : vector<3x32xf32> to vector<1x3x32xf32>
    tpu.vector_store %arg2[%c0, %c8, %c0_0], %3 {strides = array<i32>} : memref<1x11x32xf32, #tpu.memory_space<vmem>>, vector<1x3x32xf32>,
    %c0_1 = arith.constant 0 : index
    %c0_2 = arith.constant 0 : index
    %c0_3 = arith.constant 0 : index
    %4 = vector.load %arg1[%c0_1, %c0_2, %c0_3] : memref<1x8x32xf32, #tpu.memory_space<vmem>>, vector<1x8x32xf32>
    %5 = vector.shape_cast %4 : vector<1x8x32xf32> to vector<8x32xf32>
    %c0_4 = arith.constant 0 : index
    %c0_5 = arith.constant 0 : index
    %c0_6 = arith.constant 0 : index
    %6 = vector.load %arg2[%c0_4, %c0_5, %c0_6] : memref<1x11x32xf32, #tpu.memory_space<vmem>>, vector<1x8x32xf32>
    %7 = vector.shape_cast %6 : vector<1x8x32xf32> to vector<8x32xf32>
    %8 = vector.shape_cast %5 : vector<8x32xf32> to vector<1x8x32xf32>
    tpu.vector_store %arg2[%c0_4, %c0_5, %c0_6], %8 {strides = array<i32>} : memref<1x11x32xf32, #tpu.memory_space<vmem>>, vector<1x8x32xf32>,
    return
  }
  func.func @transform_0(%arg0: i32) -> (i32, i32, i32) {
    %c0_i32 = arith.constant 0 : i32
    %c0_i32_0 = arith.constant 0 : i32
    %c0_i32_1 = arith.constant 0 : i32
    return %arg0, %c0_i32, %c0_i32_0 : i32, i32, i32
  }
  func.func @transform_1(%arg0: i32) -> (i32, i32, i32) {
    %c0_i32 = arith.constant 0 : i32
    %c0_i32_0 = arith.constant 0 : i32
    %c0_i32_1 = arith.constant 0 : i32
    return %arg0, %c0_i32, %c0_i32_0 : i32, i32, i32
  }
}

</mosaic_0001>

<llo_original>
// kernel: tpu_custom_call.1
$region0: #{tpu_custom_call.1}
  #allocation0 [shape = 'u32[]', space=smem, size = 0x4, offset = 0x4, fixed_abs, tag = 'smem constant byte address 0x4 - core index']
  #allocation1 [shape = 'u32[144,128]{1,0:T(1,128)}', space=vmem, size = 0x12000, scoped, tag = 'internal scratch']
  %s0 = inlined_call_operand.hbm [shape: f32[2,8,32], index: 0, kind: input, shape index: {}]
  %s1 = inlined_call_operand.vmem [shape: f32[2,11,32], index: 1, kind: output, shape index: {}]
  %s2 = sld [smem:[#allocation0]]
  $region41: #{tpu_custom_call.1} parent=0
    _
  %s4 = ssub.s32 1, %s2
  %s5 = scalar_select 0, %s4, %s2
  $region1: #{tpu_custom_call.1} parent=0
    #allocation2 [shape = 'u8[8192]{0}', space=vmem, size = 0x2000, scoped, tag = 'input window, operand 0']
    #allocation3 [shape = 's32[2]{0}', space=sflag, size = 0x8, scoped, tag = 'scoped memory for tpu_custom_call.1']
    %6 = vsyncpa [#allocation3], 0
    %s7 = scalar_lea.sflag [#allocation3], 1
    %8 = vsyncpa %s7, 0
    loop: start=0, step=1, limit=4
    $region2: #{tpu_custom_call.1} parent=1 // loop_pre_header
      _
    $region3: #{tpu_custom_call.1} parent=1 // loop_header
      %s10 = sphi 0, %s14
      %p11 = scmp.ge.s32.totalorder %s10, 4
      %s20 = sphi 0, %s22
      %s23 = sphi 0, %s20
      %s24 = sphi 0, %s23
      %s40 = sphi 0, %s24
      %s46 = sphi 0, %s48
      %s49 = sphi 0, %s46
      %s50 = sphi 0, %s49
      %s66 = sphi 0, %s50
    $region4: #{tpu_custom_call.1} parent=1 // loop_header_branch
      %13 = sbr.rel (%p11) target = $region8
    $region5: #{tpu_custom_call.1} parent=1 // loop_body
      %s15 = ssub.s32 %s10, 1
      %s16 = ssub.s32 %s10, 2
      %s17 = sadd.s32 %s10, 1
      %s18 = ssub.s32 %s10, %s17
      %p19 = scmp.eq.s32.totalorder %s18, 0
      %s21 = sadd.s32 %s20, 1
      %s22 = scalar_select %p19, %s20, %s21
      %p25 = pneg %p19
      %p26 = scmp.eq.s32.totalorder %s10, 1
      %p27 = por %p25, %p26
      %p28 = scmp.ne.s32.totalorder %s20, %s23
      %p29 = scmp.eq.s32.totalorder %s10, 0
      %p30 = por %p28, %p29
      %p31 = scmp.ne.s32.totalorder %s20, %s23
      %p32 = scmp.eq.s32.totalorder %s15, 1
      %p33 = por %p31, %p32
      %p34 = scmp.ne.s32.totalorder %s23, %s24
      %p35 = scmp.eq.s32.totalorder %s15, 0
      %p36 = por %p34, %p35
      %p37 = scmp.ne.s32.totalorder %s23, %s24
      %p38 = scmp.eq.s32.totalorder %s16, 1
      %p39 = por %p37, %p38
      %p41 = scmp.ne.s32.totalorder %s24, %s40
      %p42 = scmp.eq.s32.totalorder %s16, 0
      %p43 = por %p41, %p42
      %s44 = ssub.s32 %s10, %s17
      %p45 = scmp.eq.s32.totalorder %s44, 0
      %s47 = sadd.s32 %s46, 1
      %s48 = scalar_select %p45, %s46, %s47
      %p51 = pneg %p45
      %p52 = scmp.eq.s32.totalorder %s10, 1
      %p53 = por %p51, %p52
      %p54 = scmp.ne.s32.totalorder %s46, %s49
      %p55 = scmp.eq.s32.totalorder %s10, 0
      %p56 = por %p54, %p55
      %p57 = scmp.ne.s32.totalorder %s46, %s49
      %p58 = scmp.eq.s32.totalorder %s15, 1
      %p59 = por %p57, %p58
      %p60 = scmp.ne.s32.totalorder %s49, %s50
      %p61 = scmp.eq.s32.totalorder %s15, 0
      %p62 = por %p60, %p61
      %p63 = scmp.ne.s32.totalorder %s49, %s50
      %p64 = scmp.eq.s32.totalorder %s16, 1
      %p65 = por %p63, %p64
      %p67 = scmp.ne.s32.totalorder %s50, %s66
      %p68 = scmp.eq.s32.totalorder %s16, 0
      %p69 = por %p67, %p68
      %p70 = scmp.le.s32.totalorder 1, %s10
      %p71 = scmp.lt.s32.totalorder %s10, 3
      %p72 = pnand %p70, %p71
      %p73 = pneg %p72
      // Predicated region
      $region9: #{tpu_custom_call.1} parent=5 // pred_check
        _
      $region10: #{tpu_custom_call.1} parent=5 // pred_check_branch
        %75 = sbr.rel (%p72) target = $region12
      $region11: #{tpu_custom_call.1} parent=5 // pred_region
        %s76 = ssub.s32 %s10, 1
      $region12: #{tpu_custom_call.1} parent=5 // pred_fallthru
        _
      %p77 = scmp.lt.s32.totalorder %s10, 2
      // Predicated region
      $region13: #{tpu_custom_call.1} parent=5 // pred_check
        %p78 = pneg %p77
      $region14: #{tpu_custom_call.1} parent=5 // pred_check_branch
        %80 = sbr.rel (%p78) target = $region16
      $region15: #{tpu_custom_call.1} parent=5 // pred_region
        // Predicated region
        $region17: #{tpu_custom_call.1} parent=15 // pred_check
          %p81 = pneg %p30
        $region18: #{tpu_custom_call.1} parent=15 // pred_check_branch
          %83 = sbr.rel (%p81) target = $region20
        $region19: #{tpu_custom_call.1} parent=15 // pred_region
          %s84 = sand.u32 %s20, 1
          %s85 = scalar_lea.sflag [#allocation3], %s84
          %s86 = sand.u32 %s20, 1
          %s87 = smul.addr %s86, 8
          %s88 = scalar_lea.vmem [#allocation2], %s87
          %s90 = ssub.s32 128, 128
          %91 = vsyncadd %s85, %s90
          %s92 = smul.addr %s10, 128
          %s93 = scalar_lea.hbm %s0, %s92
          %s95 = sshll.u32 %s88, 4
          %s96 = int_to_ptr.vmem [resolvable:$true] %s95
          %98 = dma.hbm_to_vmem [thread:$0]  %s93, 128, %s96, %s85
        $region20: #{tpu_custom_call.1} parent=15 // pred_fallthru
          _
      $region16: #{tpu_custom_call.1} parent=5 // pred_fallthru
        _
      %p99 = scmp.le.s32.totalorder 1, %s10
      %p100 = scmp.lt.s32.totalorder %s10, 3
      %p101 = pnand %p99, %p100
      %p102 = pneg %p101
      // Predicated region
      $region21: #{tpu_custom_call.1} parent=5 // pred_check
        _
      $region22: #{tpu_custom_call.1} parent=5 // pred_check_branch
        %104 = sbr.rel (%p101) target = $region24
      $region23: #{tpu_custom_call.1} parent=5 // pred_region
        %s105 = ssub.s32 %s10, 1
        %s106 = sand.u32 %s23, 1
        %s107 = scalar_lea.sflag [#allocation3], %s106
        %s108 = sand.u32 %s23, 1
        %s109 = smul.addr %s108, 8
        %s110 = scalar_lea.vmem [#allocation2], %s109
        // Predicated region
        $region25: #{tpu_custom_call.1} parent=23 // pred_check
          %p111 = pneg %p36
        $region26: #{tpu_custom_call.1} parent=23 // pred_check_branch
          %113 = sbr.rel (%p111) target = $region28
        $region27: #{tpu_custom_call.1} parent=23 // pred_region
          %114 = dma.done %s107, 128
        $region28: #{tpu_custom_call.1} parent=23 // pred_fallthru
          _
        %s115 = sand.u32 %s23, 1
        %s116 = scalar_lea.sflag [#allocation3], %s115
        %s117 = sand.u32 %s23, 1
        %s118 = smul.addr %s117, 8
        %s119 = scalar_lea.vmem [#allocation2], %s118
        %p120 = pneg %p36
        %p121 = pneg %p33
        %p122 = pneg %p62
        %p123 = pneg %p59
        %p124 = scmp.lt.s32.totalorder %s15, 1
        %s125 = scalar_select %p124, %s15, 1
        %s126 = smul.addr %s125, 2
        %s127 = smul.addr %s126, 8
        %s128 = scalar_lea.vmem %s1, %s127
        %p129 = scmp.lt.s32.totalorder %s15, 1
        %s130 = scalar_select %p129, %s15, 1
        %s131 = smul.addr %s130, 2
        %s132 = smul.addr %s131, 8
        %s133 = scalar_lea.vmem %s1, %s132
        %vm134 = vcmask 256000
        %135 = vst.msk [vmem:[%s133 + $0x8] sm:$0x7] %vm134, 0.0
        %v136 = vld [vmem:[%s110] sm:$0xff]
        %vm137 = vcmask 261120
        %138 = vst.msk [vmem:[%s133] sm:$0xff] %vm137, %v136
        %p139 = scmp.lt.s32.totalorder %s15, 1
        %s140 = scalar_select %p139, %s15, 1
        %s141 = smul.addr %s140, 2
        %s142 = smul.addr %s141, 8
        %s143 = scalar_lea.vmem %s1, %s142
        // Predicated region
        $region29: #{tpu_custom_call.1} parent=23 // pred_check
          %p144 = pneg %p59
        $region30: #{tpu_custom_call.1} parent=23 // pred_check_branch
          %146 = sbr.rel (%p144) target = $region32
        $region31: #{tpu_custom_call.1} parent=23 // pred_region
          _
        $region32: #{tpu_custom_call.1} parent=23 // pred_fallthru
          _
      $region24: #{tpu_custom_call.1} parent=5 // pred_fallthru
        _
      %p147 = scmp.le.s32.totalorder 2, %s10
      // Predicated region
      $region33: #{tpu_custom_call.1} parent=5 // pred_check
        %p148 = pneg %p147
      $region34: #{tpu_custom_call.1} parent=5 // pred_check_branch
        %150 = sbr.rel (%p148) target = $region36
      $region35: #{tpu_custom_call.1} parent=5 // pred_region
        %s151 = ssub.s32 %s10, 2
        // Predicated region
        $region37: #{tpu_custom_call.1} parent=35 // pred_check
          %p152 = pneg %p65
        $region38: #{tpu_custom_call.1} parent=35 // pred_check_branch
          %154 = sbr.rel (%p152) target = $region40
        $region39: #{tpu_custom_call.1} parent=35 // pred_region
          %p155 = scmp.lt.s32.totalorder %s16, 1
          %s156 = scalar_select %p155, %s16, 1
          %s157 = smul.addr %s156, 2
          %s158 = smul.addr %s157, 8
          %s159 = scalar_lea.vmem %s1, %s158
        $region40: #{tpu_custom_call.1} parent=35 // pred_fallthru
          _
      $region36: #{tpu_custom_call.1} parent=5 // pred_fallthru
        _
    $region6: #{tpu_custom_call.1} parent=1 // loop_footer
      %s14 = sadd.s32 1, %s10
    $region7: #{tpu_custom_call.1} parent=1 // loop_footer_branch
      %9 = sbr.rel target = $region3
    $region8: #{tpu_custom_call.1} parent=1 // loop_exit
      _
    %160 = vsyncpa [#allocation3], 1
    %s161 = scalar_lea.sflag [#allocation3], 1
    %162 = vsyncpa %s161, 1

</llo_original>
